<compile_context>
chip_gen: v5e
topology: v5e:2x2
jax: 0.10.0
libtpu: 0.0.40
codegen_flags: <defaults>
</compile_context>

<pallas_src>
import jax
import jax.numpy as jnp
from jax import lax
from jax.experimental import pallas as pl
from jax.experimental.pallas import tpu as pltpu


def _round_up(x, m):
    return ((x + m - 1) // m) * m


def _pick_tm(B, tm_max):
    """Batch tile size."""
    if B > tm_max:
        return tm_max
    if B >= 512:
        # Split into (at least) two tiles so the "parallel" batch axis can be
        # sharded across both TensorCores on multi-TC parts (v7x).
        return _round_up((B + 1) // 2, 8)
    return B  # full dim (always legal as a block dim)


# ----------------------------------------------------------------------------
# Kernels
# ----------------------------------------------------------------------------
def _linear_kernel_1k(x_ref, w_ref, b_ref, o_ref):
    """Single K tile: y_tile = x_tile @ W^T + b, no scratch, no pl.when."""
    o_ref[...] = (
        lax.dot_general(
            x_ref[...], w_ref[...],
            dimension_numbers=(((1,), (1,)), ((), ())),   # x @ W^T, no W copy
            preferred_element_type=jnp.float32,
        )
        + b_ref[...]
    ).astype(o_ref.dtype)


def _make_multik_kernel(tk, in_f, acc_in_out):
    """K is gridded (last, 'arbitrary'); accumulate into the resident output
    block when it is f32, otherwise into an f32 scratch."""
    mask_tail = (in_f % tk) != 0

    def kernel(x_ref, w_ref, b_ref, o_ref, *scratch):
        k = pl.program_id(1)
        x = x_ref[...]
        w = w_ref[...]
        if mask_tail:
            # Zero the out-of-range tail lanes of the last K tile (both
            # operands, so boundary garbage can never leak NaN/Inf).  A couple
            # of VPU ops, hidden under the DMA.
            col_x = lax.broadcasted_iota(jnp.int32, x.shape, 1)
            x = jnp.where(k * tk + col_x < in_f, x, jnp.zeros_like(x))
            col_w = lax.broadcasted_iota(jnp.int32, w.shape, 1)
            w = jnp.where(k * tk + col_w < in_f, w, jnp.zeros_like(w))

        part = lax.dot_general(
            x, w,
            dimension_numbers=(((1,), (1,)), ((), ())),
            preferred_element_type=jnp.float32,
        )

        acc_ref = o_ref if acc_in_out else scratch[0]

        @pl.when(k == 0)
        def _():
            acc_ref[...] = jnp.zeros_like(acc_ref)

        acc_ref[...] += part.astype(acc_ref.dtype)

        @pl.when(k == pl.num_programs(1) - 1)
        def _():
            # Bias added exactly once, in the finalize branch.
            o_ref[...] = (acc_ref[...] + b_ref[...]).astype(o_ref.dtype)

    return kernel


# ----------------------------------------------------------------------------
# Wrapper
# ----------------------------------------------------------------------------
def linear_regression_forward(x, weight, bias, *, tm_max=1024, tk_max=1024):
    """y = x @ weight.T + bias  (PyTorch nn.Linear semantics).

    x:      (B, inputSize)
    weight: (outputSize, inputSize)  -- PyTorch layout, never transposed/copied
    bias:   (outputSize,)

    Defaults keep the double-buffered footprint (~8-9 MiB) inside every
    generation's default scoped VMEM (v5e 16 MiB, v6e/v7x 32 MiB).  On v6e/v7x
    larger tiles can be unlocked by raising tm_max/tk_max together with
    pltpu.CompilerParams(vmem_limit_bytes=...).
    """
    B, in_f = x.shape
    out_f, in_f_w = weight.shape
    assert in_f == in_f_w
    b2 = bias.reshape(1, out_f)

    tm = _pick_tm(B, tm_max)
    nbt = pl.cdiv(B, tm)

    if in_f <= tk_max:
        # ---- common case: one K tile, no accumulator, weight/bias resident.
        kernel = _linear_kernel_1k
        grid = (nbt,)
        in_specs = [
            pl.BlockSpec((tm, in_f), lambda i: (i, 0)),        # x tile
            pl.BlockSpec((out_f, in_f), lambda i: (0, 0)),     # weight (resident)
            pl.BlockSpec((1, out_f), lambda i: (0, 0)),        # bias   (resident)
        ]
        out_specs = pl.BlockSpec((tm, out_f), lambda i: (i, 0))
        scratch_shapes = []
        dim_sem = ("parallel",)
    else:
        # ---- K gridded last ('arbitrary'); ragged tail masked in-kernel.
        tk = tk_max                                            # multiple of 128
        nkt = pl.cdiv(in_f, tk)
        acc_in_out = (x.dtype == jnp.float32)
        kernel = _make_multik_kernel(tk, in_f, acc_in_out)
        grid = (nbt, nkt)
        in_specs = [
            pl.BlockSpec((tm, tk), lambda i, k: (i, k)),       # x tile
            pl.BlockSpec((out_f, tk), lambda i, k: (0, k)),    # weight (out, in)
            pl.BlockSpec((1, out_f), lambda i, k: (0, 0)),     # bias (resident)
        ]
        out_specs = pl.BlockSpec((tm, out_f), lambda i, k: (i, 0))
        scratch_shapes = (
            [] if acc_in_out else [pltpu.VMEM((tm, out_f), jnp.float32)]
        )
        dim_sem = ("parallel", "arbitrary")

    return pl.pallas_call(
        kernel,
        out_shape=jax.ShapeDtypeStruct((B, out_f), x.dtype),
        grid=grid,
        in_specs=in_specs,
        out_specs=out_specs,
        scratch_shapes=scratch_shapes,
        compiler_params=pltpu.CompilerParams(dimension_semantics=dim_sem),
    )(x, weight, b2)


# ----------------------------------------------------------------------------
# Self-test
# ----------------------------------------------------------------------------
if __name__ == "__main__":
    fwd = jax.jit(linear_regression_forward, static_argnames=("tm_max", "tk_max"))

    key = jax.random.PRNGKey(0)

    # --- Test 1: small shapes consistent with nn.Linear(inputSize, outputSize)
    batch, input_size, output_size = 8, 32, 16
    k1, k2, k3, k4, k5, k6 = jax.random.split(key, 6)

    bound = 1.0 / (input_size ** 0.5)   # PyTorch-like U(-1/sqrt(in), 1/sqrt(in))
    x = jax.random.normal(k1, (batch, input_size), dtype=jnp.float32)
    weight = jax.random.uniform(k2, (output_size, input_size),
                                minval=-bound, maxval=bound, dtype=jnp.float32)
    bias = jax.random.uniform(k3, (output_size,),
                              minval=-bound, maxval=bound, dtype=jnp.float32)

    y = jax.block_until_ready(fwd(x, weight, bias))
    y_ref = x @ weight.T + bias
    assert y.shape == (batch, output_size)
    assert jnp.allclose(y, y_ref, atol=1e-5, rtol=1e-5)

    # --- Test 2: exercise the gridded-K path (ragged K tail, partial batch
    #             tile, accumulate-into-output) by shrinking the tile caps.
    B2, in2, out2 = 520, 300, 5
    bound2 = 1.0 / (in2 ** 0.5)
    x2 = jax.random.normal(k4, (B2, in2), dtype=jnp.float32)
    w2 = jax.random.uniform(k5, (out2, in2),
                            minval=-bound2, maxval=bound2, dtype=jnp.float32)
    bb2 = jax.random.uniform(k6, (out2,),
                             minval=-bound2, maxval=bound2, dtype=jnp.float32)

    y2 = jax.block_until_ready(fwd(x2, w2, bb2, tm_max=256, tk_max=128))
    y2_ref = x2 @ w2.T + bb2
    assert y2.shape == (B2, out2)
    assert jnp.allclose(y2, y2_ref, atol=1e-4, rtol=1e-4)

    print("KERNEL_OK")
</pallas_src>

<mosaic_0001>
module attributes {stable_mosaic.version = 11 : i64} {
  func.func @_linear_kernel_1k(%arg0: i32, %arg1: memref<8x32xf32, #tpu.memory_space<vmem>>, %arg2: memref<16x32xf32, #tpu.memory_space<vmem>>, %arg3: memref<1x16xf32, #tpu.memory_space<vmem>>, %arg4: memref<8x16xf32, #tpu.memory_space<vmem>>) attributes {dimension_semantics = [#tpu.dimension_semantics<parallel>], iteration_bounds = array<i64: 1>, scalar_prefetch = 0 : i64, scratch_operands = 0 : i64, tpu.core_type = #tpu.core_type<tc>, window_params = [{transform_indices = @transform_0, window_bounds = array<i64: 8, 32>}, {pipeline_mode = #tpu.pipeline_mode<synchronous>, transform_indices = @transform_1, window_bounds = array<i64: 16, 32>}, {pipeline_mode = #tpu.pipeline_mode<synchronous>, transform_indices = @transform_2, window_bounds = array<i64: 1, 16>}, {transform_indices = @transform_3, window_bounds = array<i64: 8, 16>}]} {
    %c0 = arith.constant 0 : index
    %c0_0 = arith.constant 0 : index
    %0 = vector.load %arg1[%c0, %c0_0] : memref<8x32xf32, #tpu.memory_space<vmem>>, vector<8x32xf32>
    %c0_1 = arith.constant 0 : index
    %c0_2 = arith.constant 0 : index
    %1 = vector.load %arg2[%c0_1, %c0_2] : memref<16x32xf32, #tpu.memory_space<vmem>>, vector<16x32xf32>
    %cst = arith.constant dense<0.000000e+00> : vector<8x16xf32>
    %2 = tpu.matmul %0, %1, %cst {dimension_numbers = #tpu.dot_dimension_numbers<[1], [1], [0], [0], [0, 0, 1, 0], [], []>} : vector<8x32xf32>, vector<16x32xf32>, vector<8x16xf32> -> vector<8x16xf32>
    %c0_3 = arith.constant 0 : index
    %c0_4 = arith.constant 0 : index
    %3 = vector.load %arg3[%c0_3, %c0_4] : memref<1x16xf32, #tpu.memory_space<vmem>>, vector<1x16xf32>
    %4 = vector.broadcast %3 : vector<1x16xf32> to vector<8x16xf32>
    %5 = arith.addf %2, %4 : vector<8x16xf32>
    %c0_5 = arith.constant 0 : index
    %c0_6 = arith.constant 0 : index
    %6 = vector.load %arg4[%c0_5, %c0_6] : memref<8x16xf32, #tpu.memory_space<vmem>>, vector<8x16xf32>
    tpu.vector_store %arg4[%c0_5, %c0_6], %5 {strides = array<i32>} : memref<8x16xf32, #tpu.memory_space<vmem>>, vector<8x16xf32>,
    return
  }
  func.func @transform_0(%arg0: i32) -> (i32, i32) {
    %c0_i32 = arith.constant 0 : i32
    %c0_i32_0 = arith.constant 0 : i32
    return %arg0, %c0_i32 : i32, i32
  }
  func.func @transform_1(%arg0: i32) -> (i32, i32) {
    %c0_i32 = arith.constant 0 : i32
    %c0_i32_0 = arith.constant 0 : i32
    %c0_i32_1 = arith.constant 0 : i32
    return %c0_i32, %c0_i32_0 : i32, i32
  }
  func.func @transform_2(%arg0: i32) -> (i32, i32) {
    %c0_i32 = arith.constant 0 : i32
    %c0_i32_0 = arith.constant 0 : i32
    %c0_i32_1 = arith.constant 0 : i32
    return %c0_i32, %c0_i32_0 : i32, i32
  }
  func.func @transform_3(%arg0: i32) -> (i32, i32) {
    %c0_i32 = arith.constant 0 : i32
    %c0_i32_0 = arith.constant 0 : i32
    return %arg0, %c0_i32 : i32, i32
  }
}

</mosaic_0001>

<llo_original>
// kernel: linear_regression_forward.1
$region0: #{linear_regression_forward.1}
  #allocation0 [shape = 'u32[]', space=smem, size = 0x4, offset = 0x4, fixed_abs, tag = 'smem constant byte address 0x4 - core index']
  #allocation1 [shape = 'u32[72,128]{1,0:T(1,128)}', space=vmem, size = 0x9000, scoped, tag = 'internal scratch']
  %s0 = inlined_call_operand.hbm [shape: f32[8,32], index: 0, kind: input, shape index: {}]
  %s1 = inlined_call_operand.hbm [shape: f32[16,32], index: 1, kind: input, shape index: {}]
  %s2 = inlined_call_operand.vmem [shape: f32[1,16], index: 2, kind: input, shape index: {}]
  %s3 = inlined_call_operand.hbm [shape: f32[8,16], index: 3, kind: output, shape index: {}]
  %s4 = sld [smem:[#allocation0]]
  $region30: #{linear_regression_forward.1} parent=0
    _
  %s6 = ssub.s32 1, %s4
  %s7 = scalar_select 0, %s6, %s4
  $region1: #{linear_regression_forward.1} parent=0
    #allocation2 [shape = 'u8[4096]{0}', space=vmem, size = 0x1000, scoped, tag = 'input window, operand 0, single buffered']
    #allocation3 [shape = 's32[1]{0}', space=sflag, size = 0x4, scoped, tag = 'scoped memory for linear_regression_forward.1']
    #allocation4 [shape = 's32[1]{0}', space=sflag, size = 0x4, scoped, tag = 'scoped memory for linear_regression_forward.1']
    #allocation5 [shape = 'u8[8192]{0}', space=vmem, size = 0x2000, scoped, tag = 'input window, operand 1, single buffered']
    #allocation6 [shape = 's32[1]{0}', space=sflag, size = 0x4, scoped, tag = 'scoped memory for linear_regression_forward.1']
    #allocation7 [shape = 'u8[4096]{0}', space=vmem, size = 0x1000, scoped, tag = 'output window, operand 0, single buffered']
    %8 = vsyncpa [#allocation3], 0
    %9 = vsyncpa [#allocation6], 0
    %10 = vsyncpa [#allocation4], 0
    // Predicated region
    $region2: #{linear_regression_forward.1} parent=1 // pred_check
      _
    $region3: #{linear_regression_forward.1} parent=1 // pred_check_branch
      %12 = sbr.rel (0) target = $region5
    $region4: #{linear_regression_forward.1} parent=1 // pred_region
      %14 = vsyncadd [#allocation3], 0
      %s16 = sshll.u32 %s0, 4
      %s17 = int_to_ptr.hbm [resolvable:$true] %s16
      %s18 = sshll.u32 [#allocation2], 4
      %s19 = int_to_ptr.vmem [resolvable:$true] %s18
      %21 = dma.hbm_to_vmem [thread:$0]  %s17, 128, %s19, [#allocation3]
    $region5: #{linear_regression_forward.1} parent=1 // pred_fallthru
      _
    // Predicated region
    $region6: #{linear_regression_forward.1} parent=1 // pred_check
      _
    $region7: #{linear_regression_forward.1} parent=1 // pred_check_branch
      %23 = sbr.rel (0) target = $region9
    $region8: #{linear_regression_forward.1} parent=1 // pred_region
      %25 = vsyncadd [#allocation6], 0
      %s26 = sshll.u32 %s1, 4
      %s27 = int_to_ptr.hbm [resolvable:$true] %s26
      %s28 = sshll.u32 [#allocation5], 4
      %s29 = int_to_ptr.vmem [resolvable:$true] %s28
      %34 = dma.hbm_to_vmem [thread:$0]  %s27, 256, %s29, [#allocation6], 128, 128, 8
    $region9: #{linear_regression_forward.1} parent=1 // pred_fallthru
      _
    // Predicated region
    $region10: #{linear_regression_forward.1} parent=1 // pred_check
      _
    $region11: #{linear_regression_forward.1} parent=1 // pred_check_branch
      %36 = sbr.rel (0) target = $region13
    $region12: #{linear_regression_forward.1} parent=1 // pred_region
      _
    $region13: #{linear_regression_forward.1} parent=1 // pred_fallthru
      _
    // Predicated region
    $region14: #{linear_regression_forward.1} parent=1 // pred_check
      _
    $region15: #{linear_regression_forward.1} parent=1 // pred_check_branch
      %38 = sbr.rel (0) target = $region17
    $region16: #{linear_regression_forward.1} parent=1 // pred_region
      %40 = dma.done [#allocation3], 128
    $region17: #{linear_regression_forward.1} parent=1 // pred_fallthru
      _
    // Predicated region
    $region18: #{linear_regression_forward.1} parent=1 // pred_check
      _
    $region19: #{linear_regression_forward.1} parent=1 // pred_check_branch
      %42 = sbr.rel (0) target = $region21
    $region20: #{linear_regression_forward.1} parent=1 // pred_region
      %44 = dma.done [#allocation6], 256
    $region21: #{linear_regression_forward.1} parent=1 // pred_fallthru
      _
    %v45 = vld [vmem:[#allocation2] sm:$0xff]
    %v46 = vld [vmem:[#allocation5] sm:$0xff]
    %v47 = vld [vmem:[#allocation5 + $0x8] sm:$0xff]
    %v48 = vld [vmem:[%s2] sm:$0x1]
    %v50 = vperm.slane %v48, 0
    %vm52 = vcmask 261120
    %v54 = vsel %vm52, %v45, 0
    %v57 = vsel %vm52, %v46, 0
    %v60 = vsel %vm52, %v47, 0
    %62 = vmatpush.xpose.msra.mxu0 0.0
    %63 = vmatpush.xpose.msra.mxu0 0.0
    %64 = vmatpush.xpose.msra.mxu0 0.0
    %65 = vmatpush.xpose.msra.mxu0 0.0
    %66 = vmatpush.xpose.msra.mxu0 0.0
    %67 = vmatpush.xpose.msra.mxu0 0.0
    %68 = vmatpush.xpose.msra.mxu0 0.0
    %69 = vmatpush.xpose.msra.mxu0 0.0
    %70 = vmatpush.xpose.msra.mxu0 0.0
    %71 = vmatpush.xpose.msra.mxu0 0.0
    %72 = vmatpush.xpose.msra.mxu0 0.0
    %73 = vmatpush.xpose.msra.mxu0 0.0
    %74 = vmatpush.xpose.msra.mxu0 0.0
    %75 = vmatpush.xpose.msra.mxu0 0.0
    %76 = vmatpush.xpose.msra.mxu0 %v60
    %77 = vmatpush.xpose.msra.mxu0 %v57
    %78 = vmatmul.f32.gmra.mxu0 %v54
    %v79 = vpop.f32.mrf.mxu0
    %v80 = vadd.f32 %v50, %v79
    %81 = vdwg.mxu0
    %vm82 = vcmask 130048
    %83 = vst.msk [vmem:[#allocation7] sm:$0xff] %vm82, %v80
    // Predicated region
    $region22: #{linear_regression_forward.1} parent=1 // pred_check
      _
    $region23: #{linear_regression_forward.1} parent=1 // pred_check_branch
      %85 = sbr.rel (0) target = $region25
    $region24: #{linear_regression_forward.1} parent=1 // pred_region
      %87 = vsyncadd [#allocation4], 0
      %s89 = sshll.u32 [#allocation7], 4
      %s90 = int_to_ptr.vmem [resolvable:$true] %s89
      %s91 = sshll.u32 %s3, 4
      %s92 = int_to_ptr.hbm [resolvable:$true] %s91
      %94 = dma.vmem_to_hbm [thread:$0]  %s90, 128, %s92, [#allocation4]
    $region25: #{linear_regression_forward.1} parent=1 // pred_fallthru
      _
    // Predicated region
    $region26: #{linear_regression_forward.1} parent=1 // pred_check
      _
    $region27: #{linear_regression_forward.1} parent=1 // pred_check_branch
      %96 = sbr.rel (0) target = $region29
    $region28: #{linear_regression_forward.1} parent=1 // pred_region
      %98 = dma.done [#allocation4], 128
    $region29: #{linear_regression_forward.1} parent=1 // pred_fallthru
      _
    %99 = vsyncpa [#allocation3], 1
    %100 = vsyncpa [#allocation6], 1
    %101 = vsyncpa [#allocation4], 1

</llo_original>
